<compile_context>
chip_gen: v7x
topology: tpu7x:2x2x1
jax: 0.10.0
libtpu: 0.0.40
codegen_flags: <defaults>
</compile_context>

<pallas_src>
import numpy as np
import jax
import jax.numpy as jnp
from jax.experimental import pallas as pl
from jax.experimental.pallas import tpu as pltpu

KH = KW = 5
PAD = 2
CIN = 3
COUT = 3

_LANE = 128
_SUBLANE = 8
_TEMP_PLANES = 8             # head-room for in-kernel (B, Hpr, Wpr) temporaries
_VMEM_BUDGET_FRACTION = 0.6  # fraction of physical VMEM used when sizing blocks


def _srm_weights() -> np.ndarray:
    """Deterministic SRM filter bank, shape (out=3, in=3, 5, 5), float32."""
    srm1 = np.array(
        [[0, 0, 0, 0, 0],
         [0, -1, 2, -1, 0],
         [0, 2, -4, 2, 0],
         [0, -1, 2, -1, 0],
         [0, 0, 0, 0, 0]], dtype=np.float32) / 4.0
    srm2 = np.array(
        [[-1, 2, -2, 2, -1],
         [2, -6, 8, -6, 2],
         [-2, 8, -12, 8, -2],
         [2, -6, 8, -6, 2],
         [-1, 2, -2, 2, -1]], dtype=np.float32) / 12.0
    srm3 = np.array(
        [[0, 0, 0, 0, 0],
         [0, 0, 0, 0, 0],
         [0, 1, -2, 1, 0],
         [0, 0, 0, 0, 0],
         [0, 0, 0, 0, 0]], dtype=np.float32) / 2.0
    w = np.stack([
        np.stack([srm1, srm1, srm1], axis=0),
        np.stack([srm2, srm2, srm2], axis=0),
        np.stack([srm3, srm3, srm3], axis=0),
    ], axis=0)
    return w  # (3, 3, 5, 5)


_SRM_W = _srm_weights()  # fixed, non-trainable parameter (requires_grad=False)

# The channel-sum rewrite in the kernel is exact ONLY because each output
# filter is literally identical across the 3 input channels.
assert np.array_equal(_SRM_W[:, 0], _SRM_W[:, 1])
assert np.array_equal(_SRM_W[:, 0], _SRM_W[:, 2])
_SRM_W_2D = _SRM_W[:, 0]  # (COUT, 5, 5): the per-output-filter 5x5 kernel

# Separable factorisation used by the kernel — verified at import time.
_H1 = np.array([0.0, 1.0, -2.0, 1.0, 0.0])   # 3-point laplacian
_H2 = np.array([1.0, 0.0, -2.0, 0.0, 1.0])   # spread laplacian
_E2 = np.array([0.0, 0.0, 1.0, 0.0, 0.0])    # centre-row indicator
_REC = np.stack([
    -0.25 * np.outer(_H1, _H1),
    (1.0 / 12.0) * (-6.0 * np.outer(_H1, _H1) + 2.0 * np.outer(_H2, _H1)
                    + 2.0 * np.outer(_H1, _H2) - np.outer(_H2, _H2)),
    0.5 * np.outer(_E2, _H1),
])
assert np.allclose(_REC, _SRM_W_2D, rtol=0.0, atol=1e-6)


def _round_up(x: int, m: int) -> int:
    return (x + m - 1) // m * m


def _srm_conv_kernel(x_ref, out_ref, buf_ref):
    """One batch block per grid step.

    x_ref   : (B, CIN, H, W)   f32 VMEM, unpadded input block
    out_ref : (B, COUT, H, W)  f32 VMEM
    buf_ref : (B, Hpr, Wpr)    f32 VMEM scratch; channel-sum plane stored at
              rows [PAD, PAD+H), cols [0, W).  Everything outside that region
              is masked to zero on load, so it never needs initialisation.
    """
    B, _, H, W = out_ref.shape
    Hpr, Wpr = buf_ref.shape[1], buf_ref.shape[2]

    # conv(x, W) == conv(sum_c x_c, W_2d) for these filters (asserted above).
    x = x_ref[...]
    xsum = (x[:, 0] + x[:, 1] + x[:, 2]).astype(jnp.float32)

    # Single interior store per step; no repeated halo-zeroing stores and no
    # program_id==0 init (megacore-safe: scratch state never carries meaning
    # across grid steps).
    buf_ref[:, PAD:PAD + H, 0:W] = xsum

    # Masked load: zero the halo rows, the right tail and the lane-rounding
    # tail, so circular lane rolls below see proper zero padding.
    row = jax.lax.broadcasted_iota(jnp.int32, (B, Hpr, Wpr), 1)
    col = jax.lax.broadcasted_iota(jnp.int32, (B, Hpr, Wpr), 2)
    valid = (row >= PAD) & (row < PAD + H) & (col < W)
    p = jnp.where(valid, buf_ref[...], 0.0)

    # Horizontal 1-D stencils via lane rotations (XLU).  Summing the +k and -k
    # rolls makes the result independent of the roll sign convention, and the
    # wrapped-around lanes come from the zeroed tail (>= 2 zero columns on
    # each side by construction of Wpr).
    def hlap(v, k):
        rolled = pltpu.roll(v, shift=k, axis=2) + pltpu.roll(v, shift=Wpr - k, axis=2)
        return rolled - 2.0 * v

    a = hlap(p, 1)    # h1 * x  (all Hpr rows; halo rows stay exactly zero)
    bh = hlap(p, 2)   # h2 * x

    # Vertical 1-D combines via static sublane slices (output row i lives at
    # plane row i + PAD).
    a_c = a[:, PAD:PAD + H]
    va1 = a[:, 1:H + 1] + a[:, 3:H + 3] - 2.0 * a_c           # v1 * (h1 * x)
    va2 = a[:, 0:H] + a[:, 4:H + 4] - 2.0 * a_c               # v2 * (h1 * x)

    out_ref[:, 0, :, :] = (-0.25 * va1[:, :, 0:W]).astype(out_ref.dtype)   # srm1
    out_ref[:, 2, :, :] = (0.5 * a_c[:, :, 0:W]).astype(out_ref.dtype)     # srm3

    b_c = bh[:, PAD:PAD + H]
    vb1 = bh[:, 1:H + 1] + bh[:, 3:H + 3] - 2.0 * b_c          # v1 * (h2 * x)
    vb2 = bh[:, 0:H] + bh[:, 4:H + 4] - 2.0 * b_c              # v2 * (h2 * x)

    srm2 = (-6.0 * va1 + 2.0 * va2 + 2.0 * vb1 - vb2) * (1.0 / 12.0)
    out_ref[:, 1, :, :] = srm2[:, :, 0:W].astype(out_ref.dtype)


def _vmem_capacity_bytes() -> int:
    """Physical VMEM of the attached TPU (conservative fallback if unknown)."""
    try:
        cap = int(pltpu.get_tpu_info().vmem_capacity_bytes)
        if cap > 0:
            return cap
    except Exception:
        pass
    return 64 * 1024 * 1024  # v7x-sized conservative default


def _looks_like_v7() -> bool:
    try:
        kind = jax.devices()[0].device_kind.lower()
    except Exception:
        return False
    return ("v7" in kind) or ("tpu7" in kind)


def _choose_batch_block(n: int, h: int, w: int, vmem_capacity: int) -> int:
    """Images per grid step, sized from VMEM capacity incl. temporaries."""
    hs, ws = _round_up(h, _SUBLANE), _round_up(w, _LANE)
    hpr, wpr = _round_up(h + 2 * PAD, _SUBLANE), _round_up(w + 2 * PAD, _LANE)
    io_bytes = 2 * (CIN + COUT) * hs * ws * 4        # in+out blocks, double-buffered
    scratch_bytes = hpr * wpr * 4
    temp_bytes = _TEMP_PLANES * hpr * wpr * 4        # live in-kernel planes
    per_image = io_bytes + scratch_bytes + temp_bytes

    budget = int(vmem_capacity * _VMEM_BUDGET_FRACTION)
    b = max(1, budget // per_image)
    b = min(b, n)

    # Only v7x has two TensorCores: keep >=4 grid steps there for balanced
    # megacore sharding.  Single-TC chips (v5e/v6e) run the grid serially, so
    # the biggest block that fits is best (fewer per-step overheads).
    if _looks_like_v7():
        if n >= 4:
            b = min(b, n // 4)
        elif n >= 2:
            b = min(b, n // 2)

    while n % b != 0:  # full blocks only
        b -= 1
    return b


def srm_conv2d(x: jax.Array) -> jax.Array:
    """F.conv2d(x, SRM weights, stride=1, padding=2) for NCHW input."""
    n, c, h, w = x.shape
    assert c == CIN, f"SRMConv2D expects {CIN} input channels, got {c}"
    x = x.astype(jnp.float32)

    hpr = _round_up(h + 2 * PAD, _SUBLANE)
    wpr = _round_up(w + 2 * PAD, _LANE)
    cap = _vmem_capacity_bytes()
    b_blk = _choose_batch_block(n, h, w, cap)

    # TODO(synk): add an H-tiled grid (2-row halo) for images where even a
    # single-image block exceeds the VMEM budget, and a lane-packing layout
    # fold for W < 128 so output stores stay lane-dense.
    return pl.pallas_call(
        _srm_conv_kernel,
        out_shape=jax.ShapeDtypeStruct((n, COUT, h, w), jnp.float32),
        grid_spec=pltpu.PrefetchScalarGridSpec(
            num_scalar_prefetch=0,
            grid=(n // b_blk,),
            in_specs=[
                pl.BlockSpec((b_blk, CIN, h, w), lambda i: (i, 0, 0, 0)),
            ],
            out_specs=pl.BlockSpec((b_blk, COUT, h, w), lambda i: (i, 0, 0, 0)),
            scratch_shapes=[pltpu.VMEM((b_blk, hpr, wpr), jnp.float32)],
        ),
        compiler_params=pltpu.CompilerParams(
            dimension_semantics=("parallel",),
            vmem_limit_bytes=int(cap * 0.9),
        ),
    )(x)


def _reference_np(x: np.ndarray) -> np.ndarray:
    """Direct NumPy reference for F.conv2d(x, SRM, stride=1, padding=2)."""
    x = np.asarray(x, np.float64)
    n, c, h, w = x.shape
    xp = np.pad(x, ((0, 0), (0, 0), (PAD, PAD), (PAD, PAD)))
    w5 = _SRM_W.astype(np.float64)
    out = np.zeros((n, COUT, h, w), np.float64)
    for co in range(COUT):
        for ci in range(CIN):
            for kh in range(KH):
                for kw in range(KW):
                    coef = w5[co, ci, kh, kw]
                    if coef != 0.0:
                        out[:, co] += coef * xp[:, ci, kh:kh + h, kw:kw + w]
    return out


if __name__ == "__main__":
    key = jax.random.PRNGKey(0)
    N, C, H, W = 4, 3, 16, 16  # in_channels must be 3 for the SRM filter bank
    x = jax.random.normal(key, (N, C, H, W), dtype=jnp.float32)

    y = jax.block_until_ready(srm_conv2d(x))
    assert y.shape == (N, COUT, H, W)

    y_ref = _reference_np(np.asarray(x))
    assert np.allclose(np.asarray(y, np.float64), y_ref, rtol=1e-4, atol=1e-4), \
        "mismatch vs direct conv reference"

    print("KERNEL_OK")
</pallas_src>

<mosaic_0001>
module attributes {stable_mosaic.version = 11 : i64} {
  func.func @_srm_conv_kernel(%arg0: i32, %arg1: memref<4x3x16x16xf32, #tpu.memory_space<vmem>>, %arg2: memref<4x3x16x16xf32, #tpu.memory_space<vmem>>, %arg3: memref<4x24x128xf32, #tpu.memory_space<vmem>>) attributes {dimension_semantics = [#tpu.dimension_semantics<parallel>], iteration_bounds = array<i64: 1>, scalar_prefetch = 0 : i64, scratch_operands = 1 : i64, tpu.core_type = #tpu.core_type<tc>, window_params = [{transform_indices = @transform_0, window_bounds = array<i64: 4, 3, 16, 16>}, {transform_indices = @transform_1, window_bounds = array<i64: 4, 3, 16, 16>}]} {
    %c0 = arith.constant 0 : index
    %c0_0 = arith.constant 0 : index
    %c0_1 = arith.constant 0 : index
    %c0_2 = arith.constant 0 : index
    %0 = vector.load %arg1[%c0, %c0_0, %c0_1, %c0_2] : memref<4x3x16x16xf32, #tpu.memory_space<vmem>>, vector<4x3x16x16xf32>
    %1 = vector.extract_strided_slice %0 {offsets = [0, 0, 0, 0], sizes = [4, 1, 16, 16], strides = [1, 1, 1, 1]} : vector<4x3x16x16xf32> to vector<4x1x16x16xf32>
    %2 = vector.shape_cast %1 : vector<4x1x16x16xf32> to vector<4x16x16xf32>
    %3 = vector.extract_strided_slice %0 {offsets = [0, 1, 0, 0], sizes = [4, 1, 16, 16], strides = [1, 1, 1, 1]} : vector<4x3x16x16xf32> to vector<4x1x16x16xf32>
    %4 = vector.shape_cast %3 : vector<4x1x16x16xf32> to vector<4x16x16xf32>
    %5 = arith.addf %2, %4 : vector<4x16x16xf32>
    %6 = vector.extract_strided_slice %0 {offsets = [0, 2, 0, 0], sizes = [4, 1, 16, 16], strides = [1, 1, 1, 1]} : vector<4x3x16x16xf32> to vector<4x1x16x16xf32>
    %7 = vector.shape_cast %6 : vector<4x1x16x16xf32> to vector<4x16x16xf32>
    %8 = arith.addf %5, %7 : vector<4x16x16xf32>
    %c0_3 = arith.constant 0 : index
    %c2 = arith.constant 2 : index
    %c0_4 = arith.constant 0 : index
    %9 = vector.load %arg3[%c0_3, %c2, %c0_4] : memref<4x24x128xf32, #tpu.memory_space<vmem>>, vector<4x16x16xf32>
    tpu.vector_store %arg3[%c0_3, %c2, %c0_4], %8 {strides = array<i32>} : memref<4x24x128xf32, #tpu.memory_space<vmem>>, vector<4x16x16xf32>,
    %10 = tpu.iota {dimensions = array<i32: 1>} : vector<4x24x128xi32>
    %11 = tpu.iota {dimensions = array<i32: 2>} : vector<4x24x128xi32>
    %c2_i32 = arith.constant 2 : i32
    %12 = vector.broadcast %c2_i32 : i32 to vector<4x24x128xi32>
    %13 = arith.cmpi sge, %10, %12 : vector<4x24x128xi32>
    %c18_i32 = arith.constant 18 : i32
    %14 = vector.broadcast %c18_i32 : i32 to vector<4x24x128xi32>
    %15 = arith.cmpi slt, %10, %14 : vector<4x24x128xi32>
    %16 = arith.andi %13, %15 : vector<4x24x128xi1>
    %c16_i32 = arith.constant 16 : i32
    %17 = vector.broadcast %c16_i32 : i32 to vector<4x24x128xi32>
    %18 = arith.cmpi slt, %11, %17 : vector<4x24x128xi32>
    %19 = arith.andi %16, %18 : vector<4x24x128xi1>
    %c0_5 = arith.constant 0 : index
    %c0_6 = arith.constant 0 : index
    %c0_7 = arith.constant 0 : index
    %20 = vector.load %arg3[%c0_5, %c0_6, %c0_7] : memref<4x24x128xf32, #tpu.memory_space<vmem>>, vector<4x24x128xf32>
    %cst = arith.constant 0.000000e+00 : f32
    %21 = vector.broadcast %cst : f32 to vector<4x24x128xf32>
    %22 = arith.select %19, %20, %21 : vector<4x24x128xi1>, vector<4x24x128xf32>
    %c1_i32 = arith.constant 1 : i32
    %23 = tpu.dynamic_rotate %22 by %c1_i32 dim 2 : vector<4x24x128xf32>, i32 -> vector<4x24x128xf32>
    %c127_i32 = arith.constant 127 : i32
    %24 = tpu.dynamic_rotate %22 by %c127_i32 dim 2 : vector<4x24x128xf32>, i32 -> vector<4x24x128xf32>
    %25 = arith.addf %23, %24 : vector<4x24x128xf32>
    %cst_8 = arith.constant 2.000000e+00 : f32
    %26 = vector.broadcast %cst_8 : f32 to vector<4x24x128xf32>
    %27 = arith.mulf %26, %22 : vector<4x24x128xf32>
    %28 = arith.subf %25, %27 : vector<4x24x128xf32>
    %c2_i32_9 = arith.constant 2 : i32
    %29 = tpu.dynamic_rotate %22 by %c2_i32_9 dim 2 : vector<4x24x128xf32>, i32 -> vector<4x24x128xf32>
    %c126_i32 = arith.constant 126 : i32
    %30 = tpu.dynamic_rotate %22 by %c126_i32 dim 2 : vector<4x24x128xf32>, i32 -> vector<4x24x128xf32>
    %31 = arith.addf %29, %30 : vector<4x24x128xf32>
    %cst_10 = arith.constant 2.000000e+00 : f32
    %32 = vector.broadcast %cst_10 : f32 to vector<4x24x128xf32>
    %33 = arith.mulf %32, %22 : vector<4x24x128xf32>
    %34 = arith.subf %31, %33 : vector<4x24x128xf32>
    %35 = vector.extract_strided_slice %28 {offsets = [0, 2, 0], sizes = [4, 16, 128], strides = [1, 1, 1]} : vector<4x24x128xf32> to vector<4x16x128xf32>
    %36 = vector.extract_strided_slice %28 {offsets = [0, 1, 0], sizes = [4, 16, 128], strides = [1, 1, 1]} : vector<4x24x128xf32> to vector<4x16x128xf32>
    %37 = vector.extract_strided_slice %28 {offsets = [0, 3, 0], sizes = [4, 16, 128], strides = [1, 1, 1]} : vector<4x24x128xf32> to vector<4x16x128xf32>
    %38 = arith.addf %36, %37 : vector<4x16x128xf32>
    %cst_11 = arith.constant 2.000000e+00 : f32
    %39 = vector.broadcast %cst_11 : f32 to vector<4x16x128xf32>
    %40 = arith.mulf %39, %35 : vector<4x16x128xf32>
    %41 = arith.subf %38, %40 : vector<4x16x128xf32>
    %42 = vector.extract_strided_slice %28 {offsets = [0, 0, 0], sizes = [4, 16, 128], strides = [1, 1, 1]} : vector<4x24x128xf32> to vector<4x16x128xf32>
    %43 = vector.extract_strided_slice %28 {offsets = [0, 4, 0], sizes = [4, 16, 128], strides = [1, 1, 1]} : vector<4x24x128xf32> to vector<4x16x128xf32>
    %44 = arith.addf %42, %43 : vector<4x16x128xf32>
    %cst_12 = arith.constant 2.000000e+00 : f32
    %45 = vector.broadcast %cst_12 : f32 to vector<4x16x128xf32>
    %46 = arith.mulf %45, %35 : vector<4x16x128xf32>
    %47 = arith.subf %44, %46 : vector<4x16x128xf32>
    %48 = vector.extract_strided_slice %41 {offsets = [0, 0, 0], sizes = [4, 16, 16], strides = [1, 1, 1]} : vector<4x16x128xf32> to vector<4x16x16xf32>
    %cst_13 = arith.constant -2.500000e-01 : f32
    %49 = vector.broadcast %cst_13 : f32 to vector<4x16x16xf32>
    %50 = arith.mulf %49, %48 : vector<4x16x16xf32>
    %c0_14 = arith.constant 0 : index
    %c0_15 = arith.constant 0 : index
    %c0_16 = arith.constant 0 : index
    %c0_17 = arith.constant 0 : index
    %51 = vector.load %arg2[%c0_14, %c0_15, %c0_16, %c0_17] : memref<4x3x16x16xf32, #tpu.memory_space<vmem>>, vector<4x1x16x16xf32>
    %52 = vector.shape_cast %51 : vector<4x1x16x16xf32> to vector<4x16x16xf32>
    %53 = vector.shape_cast %50 : vector<4x16x16xf32> to vector<4x1x16x16xf32>
    tpu.vector_store %arg2[%c0_14, %c0_15, %c0_16, %c0_17], %53 {strides = array<i32>} : memref<4x3x16x16xf32, #tpu.memory_space<vmem>>, vector<4x1x16x16xf32>,
    %54 = vector.extract_strided_slice %35 {offsets = [0, 0, 0], sizes = [4, 16, 16], strides = [1, 1, 1]} : vector<4x16x128xf32> to vector<4x16x16xf32>
    %cst_18 = arith.constant 5.000000e-01 : f32
    %55 = vector.broadcast %cst_18 : f32 to vector<4x16x16xf32>
    %56 = arith.mulf %55, %54 : vector<4x16x16xf32>
    %c0_19 = arith.constant 0 : index
    %c2_20 = arith.constant 2 : index
    %c0_21 = arith.constant 0 : index
    %c0_22 = arith.constant 0 : index
    %57 = vector.load %arg2[%c0_19, %c2_20, %c0_21, %c0_22] : memref<4x3x16x16xf32, #tpu.memory_space<vmem>>, vector<4x1x16x16xf32>
    %58 = vector.shape_cast %57 : vector<4x1x16x16xf32> to vector<4x16x16xf32>
    %59 = vector.shape_cast %56 : vector<4x16x16xf32> to vector<4x1x16x16xf32>
    tpu.vector_store %arg2[%c0_19, %c2_20, %c0_21, %c0_22], %59 {strides = array<i32>} : memref<4x3x16x16xf32, #tpu.memory_space<vmem>>, vector<4x1x16x16xf32>,
    %60 = vector.extract_strided_slice %34 {offsets = [0, 2, 0], sizes = [4, 16, 128], strides = [1, 1, 1]} : vector<4x24x128xf32> to vector<4x16x128xf32>
    %61 = vector.extract_strided_slice %34 {offsets = [0, 1, 0], sizes = [4, 16, 128], strides = [1, 1, 1]} : vector<4x24x128xf32> to vector<4x16x128xf32>
    %62 = vector.extract_strided_slice %34 {offsets = [0, 3, 0], sizes = [4, 16, 128], strides = [1, 1, 1]} : vector<4x24x128xf32> to vector<4x16x128xf32>
    %63 = arith.addf %61, %62 : vector<4x16x128xf32>
    %cst_23 = arith.constant 2.000000e+00 : f32
    %64 = vector.broadcast %cst_23 : f32 to vector<4x16x128xf32>
    %65 = arith.mulf %64, %60 : vector<4x16x128xf32>
    %66 = arith.subf %63, %65 : vector<4x16x128xf32>
    %67 = vector.extract_strided_slice %34 {offsets = [0, 0, 0], sizes = [4, 16, 128], strides = [1, 1, 1]} : vector<4x24x128xf32> to vector<4x16x128xf32>
    %68 = vector.extract_strided_slice %34 {offsets = [0, 4, 0], sizes = [4, 16, 128], strides = [1, 1, 1]} : vector<4x24x128xf32> to vector<4x16x128xf32>
    %69 = arith.addf %67, %68 : vector<4x16x128xf32>
    %cst_24 = arith.constant 2.000000e+00 : f32
    %70 = vector.broadcast %cst_24 : f32 to vector<4x16x128xf32>
    %71 = arith.mulf %70, %60 : vector<4x16x128xf32>
    %72 = arith.subf %69, %71 : vector<4x16x128xf32>
    %cst_25 = arith.constant -6.000000e+00 : f32
    %73 = vector.broadcast %cst_25 : f32 to vector<4x16x128xf32>
    %74 = arith.mulf %73, %41 : vector<4x16x128xf32>
    %cst_26 = arith.constant 2.000000e+00 : f32
    %75 = vector.broadcast %cst_26 : f32 to vector<4x16x128xf32>
    %76 = arith.mulf %75, %47 : vector<4x16x128xf32>
    %77 = arith.addf %74, %76 : vector<4x16x128xf32>
    %cst_27 = arith.constant 2.000000e+00 : f32
    %78 = vector.broadcast %cst_27 : f32 to vector<4x16x128xf32>
    %79 = arith.mulf %78, %66 : vector<4x16x128xf32>
    %80 = arith.addf %77, %79 : vector<4x16x128xf32>
    %81 = arith.subf %80, %72 : vector<4x16x128xf32>
    %cst_28 = arith.constant 0.0833333358 : f32
    %82 = vector.broadcast %cst_28 : f32 to vector<4x16x128xf32>
    %83 = arith.mulf %81, %82 : vector<4x16x128xf32>
    %84 = vector.extract_strided_slice %83 {offsets = [0, 0, 0], sizes = [4, 16, 16], strides = [1, 1, 1]} : vector<4x16x128xf32> to vector<4x16x16xf32>
    %c0_29 = arith.constant 0 : index
    %c1 = arith.constant 1 : index
    %c0_30 = arith.constant 0 : index
    %c0_31 = arith.constant 0 : index
    %85 = vector.load %arg2[%c0_29, %c1, %c0_30, %c0_31] : memref<4x3x16x16xf32, #tpu.memory_space<vmem>>, vector<4x1x16x16xf32>
    %86 = vector.shape_cast %85 : vector<4x1x16x16xf32> to vector<4x16x16xf32>
    %87 = vector.shape_cast %84 : vector<4x16x16xf32> to vector<4x1x16x16xf32>
    tpu.vector_store %arg2[%c0_29, %c1, %c0_30, %c0_31], %87 {strides = array<i32>} : memref<4x3x16x16xf32, #tpu.memory_space<vmem>>, vector<4x1x16x16xf32>,
    return
  }
  func.func @transform_0(%arg0: i32) -> (i32, i32, i32, i32) {
    %c0_i32 = arith.constant 0 : i32
    %c0_i32_0 = arith.constant 0 : i32
    %c0_i32_1 = arith.constant 0 : i32
    %c0_i32_2 = arith.constant 0 : i32
    return %arg0, %c0_i32, %c0_i32_0, %c0_i32_1 : i32, i32, i32, i32
  }
  func.func @transform_1(%arg0: i32) -> (i32, i32, i32, i32) {
    %c0_i32 = arith.constant 0 : i32
    %c0_i32_0 = arith.constant 0 : i32
    %c0_i32_1 = arith.constant 0 : i32
    %c0_i32_2 = arith.constant 0 : i32
    return %arg0, %c0_i32, %c0_i32_0, %c0_i32_1 : i32, i32, i32, i32
  }
}

</mosaic_0001>

<llo_original>
// kernel: tpu_custom_call.1
$region0: #{tpu_custom_call.1}
  #allocation0 [shape = 'u32[]', space=smem, size = 0x4, offset = 0x4, fixed_abs, tag = 'smem constant byte address 0x4 - core index']
  #allocation1 [shape = 'u32[144,128]{1,0:T(1,128)}', space=vmem, size = 0x12000, scoped, tag = 'internal scratch']
  #allocation2 [shape = 'f32[4,24,128]{2,1,0:T(8,128)}', space=vmem, size = 0xc000, scoped, tag = 'scratch operand']
  %s0 = inlined_call_operand.hbm [shape: f32[4,3,16,16], index: 0, kind: input, shape index: {}]
  %s1 = inlined_call_operand.hbm [shape: f32[4,3,16,16], index: 1, kind: output, shape index: {}]
  %s2 = sld [smem:[#allocation0]]
  $region18: #{tpu_custom_call.1} parent=0
    _
  %s4 = ssub.s32 1, %s2
  %s5 = scalar_select 0, %s4, %s2
  $region1: #{tpu_custom_call.1} parent=0
    #allocation3 [shape = 'u8[98304]{0}', space=vmem, size = 0x18000, scoped, tag = 'input window, operand 0, single buffered']
    #allocation4 [shape = 's32[1]{0}', space=sflag, size = 0x4, scoped, tag = 'scoped memory for tpu_custom_call.1']
    #allocation5 [shape = 's32[1]{0}', space=sflag, size = 0x4, scoped, tag = 'scoped memory for tpu_custom_call.1']
    #allocation6 [shape = 'u8[98304]{0}', space=vmem, size = 0x18000, scoped, tag = 'output window, operand 0, single buffered']
    %6 = vsyncpa [#allocation4], 0
    %7 = vsyncpa [#allocation5], 0
    // Predicated region
    $region2: #{tpu_custom_call.1} parent=1 // pred_check
      _
    $region3: #{tpu_custom_call.1} parent=1 // pred_check_branch
      %9 = sbr.rel (0) target = $region5
    $region4: #{tpu_custom_call.1} parent=1 // pred_region
      %s11 = ssub.s32 3072, 3072
      %12 = vsyncadd [#allocation4], %s11
      %s13 = sshll.u32 [#allocation3], 4
      %s14 = int_to_ptr.vmem [resolvable:$true] %s13
      %19 = dma.hbm_to_vmem [thread:$0]  %s0, 3072, %s14, [#allocation4], 128, 128, 8
    $region5: #{tpu_custom_call.1} parent=1 // pred_fallthru
      _
    // Predicated region
    $region6: #{tpu_custom_call.1} parent=1 // pred_check
      _
    $region7: #{tpu_custom_call.1} parent=1 // pred_check_branch
      %21 = sbr.rel (0) target = $region9
    $region8: #{tpu_custom_call.1} parent=1 // pred_region
      %22 = dma.done [#allocation4], 3072
    $region9: #{tpu_custom_call.1} parent=1 // pred_fallthru
      _
    %v23 = vld [vmem:[#allocation3] sm:$0xff]
    %v24 = vld [vmem:[#allocation3 + $0x8] sm:$0xff]
    %v25 = vld [vmem:[#allocation3 + $0x10] sm:$0xff]
    %v26 = vld [vmem:[#allocation3 + $0x18] sm:$0xff]
    %v27 = vld [vmem:[#allocation3 + $0x20] sm:$0xff]
    %v28 = vld [vmem:[#allocation3 + $0x28] sm:$0xff]
    %v29 = vld [vmem:[#allocation3 + $0x30] sm:$0xff]
    %v30 = vld [vmem:[#allocation3 + $0x38] sm:$0xff]
    %v31 = vld [vmem:[#allocation3 + $0x40] sm:$0xff]
    %v32 = vld [vmem:[#allocation3 + $0x48] sm:$0xff]
    %v33 = vld [vmem:[#allocation3 + $0x50] sm:$0xff]
    %v34 = vld [vmem:[#allocation3 + $0x58] sm:$0xff]
    %v35 = vld [vmem:[#allocation3 + $0x60] sm:$0xff]
    %v36 = vld [vmem:[#allocation3 + $0x68] sm:$0xff]
    %v37 = vld [vmem:[#allocation3 + $0x70] sm:$0xff]
    %v38 = vld [vmem:[#allocation3 + $0x78] sm:$0xff]
    %v39 = vld [vmem:[#allocation3 + $0x80] sm:$0xff]
    %v40 = vld [vmem:[#allocation3 + $0x88] sm:$0xff]
    %v41 = vld [vmem:[#allocation3 + $0x90] sm:$0xff]
    %v42 = vld [vmem:[#allocation3 + $0x98] sm:$0xff]
    %v43 = vld [vmem:[#allocation3 + $0xa0] sm:$0xff]
    %v44 = vld [vmem:[#allocation3 + $0xa8] sm:$0xff]
    %v45 = vld [vmem:[#allocation3 + $0xb0] sm:$0xff]
    %v46 = vld [vmem:[#allocation3 + $0xb8] sm:$0xff]
    %v47 = vadd.f32 %v23, %v25
    %v48 = vadd.f32 %v24, %v26
    %v49 = vadd.f32 %v29, %v31
    %v50 = vadd.f32 %v30, %v32
    %v51 = vadd.f32 %v35, %v37
    %v52 = vadd.f32 %v36, %v38
    %v53 = vadd.f32 %v41, %v43
    %v54 = vadd.f32 %v42, %v44
    %v55 = vadd.f32 %v47, %v27
    %v56 = vadd.f32 %v48, %v28
    %v57 = vadd.f32 %v49, %v33
    %v58 = vadd.f32 %v50, %v34
    %v59 = vadd.f32 %v51, %v39
    %v60 = vadd.f32 %v52, %v40
    %v61 = vadd.f32 %v53, %v45
    %v62 = vadd.f32 %v54, %v46
    %vm63 = vcmask 130048
    %64 = vst.msk [vmem:[#allocation2 + $0x2] sm:$0xff] %vm63, %v55
    %65 = vst.msk [vmem:[#allocation2 + $0xa] sm:$0xff] %vm63, %v56
    %66 = vst.msk [vmem:[#allocation2 + $0x1a] sm:$0xff] %vm63, %v57
    %67 = vst.msk [vmem:[#allocation2 + $0x22] sm:$0xff] %vm63, %v58
    %68 = vst.msk [vmem:[#allocation2 + $0x32] sm:$0xff] %vm63, %v59
    %69 = vst.msk [vmem:[#allocation2 + $0x3a] sm:$0xff] %vm63, %v60
    %70 = vst.msk [vmem:[#allocation2 + $0x4a] sm:$0xff] %vm63, %v61
    %71 = vst.msk [vmem:[#allocation2 + $0x52] sm:$0xff] %vm63, %v62
    %v72 = vlaneseq
    %v73 = vshrl.u32 %v72, 7
    %v74 = vadd.s32 %v73, 8
    %v75 = vadd.s32 %v73, 16
    %v76 = vlaneseq
    %v77 = vand.u32 %v76, 127
    %vm78 = vcmp.ge.s32.totalorder %v73, 2
    %vm79 = vcmp.ge.s32.totalorder %v74, 2
    %vm80 = vcmp.ge.s32.totalorder %v75, 2
    %vm81 = vcmp.lt.s32.totalorder %v73, 18
    %vm82 = vcmp.lt.s32.totalorder %v74, 18
    %vm83 = vcmp.lt.s32.totalorder %v75, 18
    %vm84 = vmand %vm78, %vm81
    %vm85 = vmand %vm79, %vm82
    %vm86 = vmand %vm80, %vm83
    %vm87 = vcmp.lt.s32.totalorder %v77, 16
    %vm88 = vmand %vm84, %vm87
    %vm89 = vmand %vm85, %vm87
    %vm90 = vmand %vm86, %vm87
    %v91 = vld [vmem:[#allocation2] sm:$0xff]
    %v92 = vld [vmem:[#allocation2 + $0x8] sm:$0xff]
    %v93 = vld [vmem:[#allocation2 + $0x10] sm:$0xff]
    %v94 = vld [vmem:[#allocation2 + $0x18] sm:$0xff]
    %v95 = vld [vmem:[#allocation2 + $0x20] sm:$0xff]
    %v96 = vld [vmem:[#allocation2 + $0x28] sm:$0xff]
    %v97 = vld [vmem:[#allocation2 + $0x30] sm:$0xff]
    %v98 = vld [vmem:[#allocation2 + $0x38] sm:$0xff]
    %v99 = vld [vmem:[#allocation2 + $0x40] sm:$0xff]
    %v100 = vld [vmem:[#allocation2 + $0x48] sm:$0xff]
    %v101 = vld [vmem:[#allocation2 + $0x50] sm:$0xff]
    %v102 = vld [vmem:[#allocation2 + $0x58] sm:$0xff]
    %v103 = vsel %vm88, %v91, 0.0
    %v104 = vsel %vm89, %v92, 0.0
    %v105 = vsel %vm90, %v93, 0.0
    %v106 = vsel %vm88, %v94, 0.0
    %v107 = vsel %vm89, %v95, 0.0
    %v108 = vsel %vm90, %v96, 0.0
    %v109 = vsel %vm88, %v97, 0.0
    %v110 = vsel %vm89, %v98, 0.0
    %v111 = vsel %vm90, %v99, 0.0
    %v112 = vsel %vm88, %v100, 0.0
    %v113 = vsel %vm89, %v101, 0.0
    %v114 = vsel %vm90, %v102, 0.0
    %115 = vrot.lane.b32.xlu0 %v103, 1
    %v116 = vpop.permute.xlu0 %115
    %117 = vrot.lane.b32.xlu0 %v104, 1
    %v118 = vpop.permute.xlu0 %117
    %119 = vrot.lane.b32.xlu0 %v105, 1
    %v120 = vpop.permute.xlu0 %119
    %121 = vrot.lane.b32.xlu0 %v106, 1
    %v122 = vpop.permute.xlu0 %121
    %123 = vrot.lane.b32.xlu0 %v107, 1
    %v124 = vpop.permute.xlu0 %123
    %125 = vrot.lane.b32.xlu0 %v108, 1
    %v126 = vpop.permute.xlu0 %125
    %127 = vrot.lane.b32.xlu0 %v109, 1
    %v128 = vpop.permute.xlu0 %127
    %129 = vrot.lane.b32.xlu0 %v110, 1
    %v130 = vpop.permute.xlu0 %129
    %131 = vrot.lane.b32.xlu0 %v111, 1
    %v132 = vpop.permute.xlu0 %131
    %133 = vrot.lane.b32.xlu0 %v112, 1
    %v134 = vpop.permute.xlu0 %133
    %135 = vrot.lane.b32.xlu0 %v113, 1
    %v136 = vpop.permute.xlu0 %135
    %137 = vrot.lane.b32.xlu0 %v114, 1
    %v138 = vpop.permute.xlu0 %137
    %139 = vrot.lane.b32.xlu0 %v103, 127
    %v140 = vpop.permute.xlu0 %139
    %141 = vrot.lane.b32.xlu0 %v104, 127
    %v142 = vpop.permute.xlu0 %141
    %143 = vrot.lane.b32.xlu0 %v105, 127
    %v144 = vpop.permute.xlu0 %143
    %145 = vrot.lane.b32.xlu0 %v106, 127
    %v146 = vpop.permute.xlu0 %145
    %147 = vrot.lane.b32.xlu0 %v107, 127
    %v148 = vpop.permute.xlu0 %147
    %149 = vrot.lane.b32.xlu0 %v108, 127
    %v150 = vpop.permute.xlu0 %149
    %151 = vrot.lane.b32.xlu0 %v109, 127
    %v152 = vpop.permute.xlu0 %151
    %153 = vrot.lane.b32.xlu0 %v110, 127
    %v154 = vpop.permute.xlu0 %153
    %155 = vrot.lane.b32.xlu0 %v111, 127
    %v156 = vpop.permute.xlu0 %155
    %157 = vrot.lane.b32.xlu0 %v112, 127
    %v158 = vpop.permute.xlu0 %157
    %159 = vrot.lane.b32.xlu0 %v113, 127
    %v160 = vpop.permute.xlu0 %159
    %161 = vrot.lane.b32.xlu0 %v114, 127
    %v162 = vpop.permute.xlu0 %161
    %v163 = vadd.f32 %v116, %v140
    %v164 = vadd.f32 %v118, %v142
    %v165 = vadd.f32 %v120, %v144
    %v166 = vadd.f32 %v122, %v146
    %v167 = vadd.f32 %v124, %v148
    %v168 = vadd.f32 %v126, %v150
    %v169 = vadd.f32 %v128, %v152
    %v170 = vadd.f32 %v130, %v154
    %v171 = vadd.f32 %v132, %v156
    %v172 = vadd.f32 %v134, %v158
    %v173 = vadd.f32 %v136, %v160
    %v174 = vadd.f32 %v138, %v162
    %v175 = vmul.f32 %v103, 2.0
    %v176 = vmul.f32 %v104, 2.0
    %v177 = vmul.f32 %v105, 2.0
    %v178 = vmul.f32 %v106, 2.0
    %v179 = vmul.f32 %v107, 2.0
    %v180 = vmul.f32 %v108, 2.0
    %v181 = vmul.f32 %v109, 2.0
    %v182 = vmul.f32 %v110, 2.0
    %v183 = vmul.f32 %v111, 2.0
    %v184 = vmul.f32 %v112, 2.0
    %v185 = vmul.f32 %v113, 2.0
    %v186 = vmul.f32 %v114, 2.0
    %v187 = vsub.f32 %v163, %v175
    %v188 = vsub.f32 %v164, %v176
    %v189 = vsub.f32 %v165, %v177
    %v190 = vsub.f32 %v166, %v178
    %v191 = vsub.f32 %v167, %v179
    %v192 = vsub.f32 %v168, %v180
    %v193 = vsub.f32 %v169, %v181
    %v194 = vsub.f32 %v170, %v182
    %v195 = vsub.f32 %v171, %v183
    %v196 = vsub.f32 %v172, %v184
    %v197 = vsub.f32 %v173, %v185
    %v198 = vsub.f32 %v174, %v186
    %199 = vrot.lane.b32.xlu0 %v103, 2
    %v200 = vpop.permute.xlu0 %199
    %201 = vrot.lane.b32.xlu0 %v104, 2
    %v202 = vpop.permute.xlu0 %201
    %203 = vrot.lane.b32.xlu0 %v105, 2
    %v204 = vpop.permute.xlu0 %203
    %205 = vrot.lane.b32.xlu0 %v106, 2
    %v206 = vpop.permute.xlu0 %205
    %207 = vrot.lane.b32.xlu0 %v107, 2
    %v208 = vpop.permute.xlu0 %207
    %209 = vrot.lane.b32.xlu0 %v108, 2
    %v210 = vpop.permute.xlu0 %209
    %211 = vrot.lane.b32.xlu0 %v109, 2
    %v212 = vpop.permute.xlu0 %211
    %213 = vrot.lane.b32.xlu0 %v110, 2
    %v214 = vpop.permute.xlu0 %213
    %215 = vrot.lane.b32.xlu0 %v111, 2
    %v216 = vpop.permute.xlu0 %215
    %217 = vrot.lane.b32.xlu0 %v112, 2
    %v218 = vpop.permute.xlu0 %217
    %219 = vrot.lane.b32.xlu0 %v113, 2
    %v220 = vpop.permute.xlu0 %219
    %221 = vrot.lane.b32.xlu0 %v114, 2
    %v222 = vpop.permute.xlu0 %221
    %223 = vrot.lane.b32.xlu0 %v103, 126
    %v224 = vpop.permute.xlu0 %223
    %225 = vrot.lane.b32.xlu0 %v104, 126
    %v226 = vpop.permute.xlu0 %225
    %227 = vrot.lane.b32.xlu0 %v105, 126
    %v228 = vpop.permute.xlu0 %227
    %229 = vrot.lane.b32.xlu0 %v106, 126
    %v230 = vpop.permute.xlu0 %229
    %231 = vrot.lane.b32.xlu0 %v107, 126
    %v232 = vpop.permute.xlu0 %231
    %233 = vrot.lane.b32.xlu0 %v108, 126
    %v234 = vpop.permute.xlu0 %233
    %235 = vrot.lane.b32.xlu0 %v109, 126
    %v236 = vpop.permute.xlu0 %235
    %237 = vrot.lane.b32.xlu0 %v110, 126
    %v238 = vpop.permute.xlu0 %237
    %239 = vrot.lane.b32.xlu0 %v111, 126
    %v240 = vpop.permute.xlu0 %239
    %241 = vrot.lane.b32.xlu0 %v112, 126
    %v242 = vpop.permute.xlu0 %241
    %243 = vrot.lane.b32.xlu0 %v113, 126
    %v244 = vpop.permute.xlu0 %243
    %245 = vrot.lane.b32.xlu0 %v114, 126
    %v246 = vpop.permute.xlu0 %245
    %v247 = vadd.f32 %v200, %v224
    %v248 = vadd.f32 %v202, %v226
    %v249 = vadd.f32 %v204, %v228
    %v250 = vadd.f32 %v206, %v230
    %v251 = vadd.f32 %v208, %v232
    %v252 = vadd.f32 %v210, %v234
    %v253 = vadd.f32 %v212, %v236
    %v254 = vadd.f32 %v214, %v238
    %v255 = vadd.f32 %v216, %v240
    %v256 = vadd.f32 %v218, %v242
    %v257 = vadd.f32 %v220, %v244
    %v258 = vadd.f32 %v222, %v246
    %v259 = vsub.f32 %v247, %v175
    %v260 = vsub.f32 %v248, %v176
    %v261 = vsub.f32 %v249, %v177
    %v262 = vsub.f32 %v250, %v178
    %v263 = vsub.f32 %v251, %v179
    %v264 = vsub.f32 %v252, %v180
    %v265 = vsub.f32 %v253, %v181
    %v266 = vsub.f32 %v254, %v182
    %v267 = vsub.f32 %v255, %v183
    %v268 = vsub.f32 %v256, %v184
    %v269 = vsub.f32 %v257, %v185
    %v270 = vsub.f32 %v258, %v186
    %vm283 = vcmask 1045504
    %v284 = vrot.slane %v187, 2
    %v285 = vrot.slane %v188, 2
    %v286 = vsel %vm283, %v284, %v285
    %v287 = vrot.slane %v189, 2
    %v288 = vsel %vm283, %v285, %v287
    %v289 = vrot.slane %v190, 2
    %v290 = vrot.slane %v191, 2
    %v291 = vsel %vm283, %v289, %v290
    %v292 = vrot.slane %v192, 2
    %v293 = vsel %vm283, %v290, %v292
    %v294 = vrot.slane %v193, 2
    %v295 = vrot.slane %v194, 2
    %v296 = vsel %vm283, %v294, %v295
    %v297 = vrot.slane %v195, 2
    %v298 = vsel %vm283, %v295, %v297
    %v299 = vrot.slane %v196, 2
    %v300 = vrot.slane %v197, 2
    %v301 = vsel %vm283, %v299, %v300
    %v302 = vrot.slane %v198, 2
    %v303 = vsel %vm283, %v300, %v302
    %v316 = vadd.f32 %v187, %v286
    %v317 = vadd.f32 %v188, %v288
    %v318 = vadd.f32 %v189, %v287
    %v319 = vadd.f32 %v190, %v291
    %v320 = vadd.f32 %v191, %v293
    %v321 = vadd.f32 %v192, %v292
    %v322 = vadd.f32 %v193, %v296
    %v323 = vadd.f32 %v194, %v298
    %v324 = vadd.f32 %v195, %v297
    %v325 = vadd.f32 %v196, %v301
    %v326 = vadd.f32 %v197, %v303
    %v327 = vadd.f32 %v198, %v302
    %v328 = vmul.f32 %v187, 2.0
    %v329 = vmul.f32 %v188, 2.0
    %v330 = vmul.f32 %v189, 2.0
    %v331 = vmul.f32 %v190, 2.0
    %v332 = vmul.f32 %v191, 2.0
    %v333 = vmul.f32 %v192, 2.0
    %v334 = vmul.f32 %v193, 2.0
    %v335 = vmul.f32 %v194, 2.0
    %v336 = vmul.f32 %v195, 2.0
    %v337 = vmul.f32 %v196, 2.0
    %v338 = vmul.f32 %v197, 2.0
    %v339 = vmul.f32 %v198, 2.0
    %vm352 = vcmask 1046528
    %v353 = vrot.slane %v328, 1
    %v354 = vrot.slane %v329, 1
    %v355 = vsel %vm352, %v353, %v354
    %v356 = vrot.slane %v330, 1
    %v357 = vsel %vm352, %v354, %v356
    %v358 = vrot.slane %v331, 1
    %v359 = vrot.slane %v332, 1
    %v360 = vsel %vm352, %v358, %v359
    %v361 = vrot.slane %v333, 1
    %v362 = vsel %vm352, %v359, %v361
    %v363 = vrot.slane %v334, 1
    %v364 = vrot.slane %v335, 1
    %v365 = vsel %vm352, %v363, %v364
    %v366 = vrot.slane %v336, 1
    %v367 = vsel %vm352, %v364, %v366
    %v368 = vrot.slane %v337, 1
    %v369 = vrot.slane %v338, 1
    %v370 = vsel %vm352, %v368, %v369
    %v371 = vrot.slane %v339, 1
    %v372 = vsel %vm352, %v369, %v371
    %v385 = vsub.f32 %v316, %v355
    %v386 = vsub.f32 %v317, %v357
    %v387 = vsub.f32 %v318, %v356
    %v388 = vsub.f32 %v319, %v360
    %v389 = vsub.f32 %v320, %v362
    %v390 = vsub.f32 %v321, %v361
    %v391 = vsub.f32 %v322, %v365
    %v392 = vsub.f32 %v323, %v367
    %v393 = vsub.f32 %v324, %v366
    %v394 = vsub.f32 %v325, %v370
    %v395 = vsub.f32 %v326, %v372
    %v396 = vsub.f32 %v327, %v371
    %vm397 = vcmask 1043456
    %v398 = vrot.slane %v187, 4
    %v399 = vrot.slane %v188, 4
    %v400 = vsel %vm397, %v398, %v399
    %v401 = vrot.slane %v189, 4
    %v402 = vsel %vm397, %v399, %v401
    %v403 = vrot.slane %v190, 4
    %v404 = vrot.slane %v191, 4
    %v405 = vsel %vm397, %v403, %v404
    %v406 = vrot.slane %v192, 4
    %v407 = vsel %vm397, %v404, %v406
    %v408 = vrot.slane %v193, 4
    %v409 = vrot.slane %v194, 4
    %v410 = vsel %vm397, %v408, %v409
    %v411 = vrot.slane %v195, 4
    %v412 = vsel %vm397, %v409, %v411
    %v413 = vrot.slane %v196, 4
    %v414 = vrot.slane %v197, 4
    %v415 = vsel %vm397, %v413, %v414
    %v416 = vrot.slane %v198, 4
    %v417 = vsel %vm397, %v414, %v416
    %v426 = vadd.f32 %v187, %v400
    %v427 = vadd.f32 %v188, %v402
    %v428 = vadd.f32 %v190, %v405
    %v429 = vadd.f32 %v191, %v407
    %v430 = vadd.f32 %v193, %v410
    %v431 = vadd.f32 %v194, %v412
    %v432 = vadd.f32 %v196, %v415
    %v433 = vadd.f32 %v197, %v417
    %v434 = vrot.slane %v328, 2
    %v435 = vrot.slane %v329, 2
    %v436 = vsel %vm283, %v434, %v435
    %v437 = vrot.slane %v330, 2
    %v438 = vsel %vm283, %v435, %v437
    %v439 = vrot.slane %v331, 2
    %v440 = vrot.slane %v332, 2
    %v441 = vsel %vm283, %v439, %v440
    %v442 = vrot.slane %v333, 2
    %v443 = vsel %vm283, %v440, %v442
    %v444 = vrot.slane %v334, 2
    %v445 = vrot.slane %v335, 2
    %v446 = vsel %vm283, %v444, %v445
    %v447 = vrot.slane %v336, 2
    %v448 = vsel %vm283, %v445, %v447
    %v449 = vrot.slane %v337, 2
    %v450 = vrot.slane %v338, 2
    %v451 = vsel %vm283, %v449, %v450
    %v452 = vrot.slane %v339, 2
    %v453 = vsel %vm283, %v450, %v452
    %v462 = vsub.f32 %v426, %v436
    %v463 = vsub.f32 %v427, %v438
    %v464 = vsub.f32 %v428, %v441
    %v465 = vsub.f32 %v429, %v443
    %v466 = vsub.f32 %v430, %v446
    %v467 = vsub.f32 %v431, %v448
    %v468 = vsub.f32 %v432, %v451
    %v469 = vsub.f32 %v433, %v453
    %v470 = vmul.f32 %v385, -0.25
    %v471 = vmul.f32 %v386, -0.25
    %v472 = vmul.f32 %v387, -0.25
    %v473 = vmul.f32 %v388, -0.25
    %v474 = vmul.f32 %v389, -0.25
    %v475 = vmul.f32 %v390, -0.25
    %v476 = vmul.f32 %v391, -0.25
    %v477 = vmul.f32 %v392, -0.25
    %v478 = vmul.f32 %v393, -0.25
    %v479 = vmul.f32 %v394, -0.25
    %v480 = vmul.f32 %v395, -0.25
    %v481 = vmul.f32 %v396, -0.25
    %vm482 = vcmask 130049
    %483 = vst.msk [vmem:[#allocation6 - $0x1] sm:$0xfe] %vm482, %v470
    %484 = vst.msk [vmem:[#allocation6 + $0x7] sm:$0xff] %vm63, %v471
    %vm485 = vcmask 122880
    %486 = vst.msk [vmem:[#allocation6 + $0xf] sm:$0x1] %vm485, %v472
    %487 = vst.msk [vmem:[#allocation6 + $0x2f] sm:$0xfe] %vm482, %v473
    %488 = vst.msk [vmem:[#allocation6 + $0x37] sm:$0xff] %vm63, %v474
    %489 = vst.msk [vmem:[#allocation6 + $0x3f] sm:$0x1] %vm485, %v475
    %490 = vst.msk [vmem:[#allocation6 + $0x5f] sm:$0xfe] %vm482, %v476
    %491 = vst.msk [vmem:[#allocation6 + $0x67] sm:$0xff] %vm63, %v477
    %492 = vst.msk [vmem:[#allocation6 + $0x6f] sm:$0x1] %vm485, %v478
    %493 = vst.msk [vmem:[#allocation6 + $0x8f] sm:$0xfe] %vm482, %v479
    %494 = vst.msk [vmem:[#allocation6 + $0x97] sm:$0xff] %vm63, %v480
    %495 = vst.msk [vmem:[#allocation6 + $0x9f] sm:$0x1] %vm485, %v481
    %v496 = vmul.f32 %v187, 0.5
    %v497 = vmul.f32 %v188, 0.5
    %v498 = vmul.f32 %v189, 0.5
    %v499 = vmul.f32 %v190, 0.5
    %v500 = vmul.f32 %v191, 0.5
    %v501 = vmul.f32 %v192, 0.5
    %v502 = vmul.f32 %v193, 0.5
    %v503 = vmul.f32 %v194, 0.5
    %v504 = vmul.f32 %v195, 0.5
    %v505 = vmul.f32 %v196, 0.5
    %v506 = vmul.f32 %v197, 0.5
    %v507 = vmul.f32 %v198, 0.5
    %s508 = scalar_lea.vmem [#allocation6], 32
    %vm509 = vcmask 130050
    %510 = vst.msk [vmem:[%s508 - $0x2] sm:$0xfc] %vm509, %v496
    %511 = vst.msk [vmem:[%s508 + $0x6] sm:$0xff] %vm63, %v497
    %vm512 = vcmask 123904
    %513 = vst.msk [vmem:[%s508 + $0xe] sm:$0x3] %vm512, %v498
    %514 = vst.msk [vmem:[%s508 + $0x2e] sm:$0xfc] %vm509, %v499
    %515 = vst.msk [vmem:[%s508 + $0x36] sm:$0xff] %vm63, %v500
    %516 = vst.msk [vmem:[%s508 + $0x3e] sm:$0x3] %vm512, %v501
    %517 = vst.msk [vmem:[%s508 + $0x5e] sm:$0xfc] %vm509, %v502
    %518 = vst.msk [vmem:[%s508 + $0x66] sm:$0xff] %vm63, %v503
    %519 = vst.msk [vmem:[%s508 + $0x6e] sm:$0x3] %vm512, %v504
    %520 = vst.msk [vmem:[%s508 + $0x8e] sm:$0xfc] %vm509, %v505
    %521 = vst.msk [vmem:[%s508 + $0x96] sm:$0xff] %vm63, %v506
    %522 = vst.msk [vmem:[%s508 + $0x9e] sm:$0x3] %vm512, %v507
    %v535 = vrot.slane %v259, 2
    %v536 = vrot.slane %v260, 2
    %v537 = vsel %vm283, %v535, %v536
    %v538 = vrot.slane %v261, 2
    %v539 = vsel %vm283, %v536, %v538
    %v540 = vrot.slane %v262, 2
    %v541 = vrot.slane %v263, 2
    %v542 = vsel %vm283, %v540, %v541
    %v543 = vrot.slane %v264, 2
    %v544 = vsel %vm283, %v541, %v543
    %v545 = vrot.slane %v265, 2
    %v546 = vrot.slane %v266, 2
    %v547 = vsel %vm283, %v545, %v546
    %v548 = vrot.slane %v267, 2
    %v549 = vsel %vm283, %v546, %v548
    %v550 = vrot.slane %v268, 2
    %v551 = vrot.slane %v269, 2
    %v552 = vsel %vm283, %v550, %v551
    %v553 = vrot.slane %v270, 2
    %v554 = vsel %vm283, %v551, %v553
    %v567 = vadd.f32 %v259, %v537
    %v568 = vadd.f32 %v260, %v539
    %v569 = vadd.f32 %v261, %v538
    %v570 = vadd.f32 %v262, %v542
    %v571 = vadd.f32 %v263, %v544
    %v572 = vadd.f32 %v264, %v543
    %v573 = vadd.f32 %v265, %v547
    %v574 = vadd.f32 %v266, %v549
    %v575 = vadd.f32 %v267, %v548
    %v576 = vadd.f32 %v268, %v552
    %v577 = vadd.f32 %v269, %v554
    %v578 = vadd.f32 %v270, %v553
    %v579 = vmul.f32 %v259, 2.0
    %v580 = vmul.f32 %v260, 2.0
    %v581 = vmul.f32 %v261, 2.0
    %v582 = vmul.f32 %v262, 2.0
    %v583 = vmul.f32 %v263, 2.0
    %v584 = vmul.f32 %v264, 2.0
    %v585 = vmul.f32 %v265, 2.0
    %v586 = vmul.f32 %v266, 2.0
    %v587 = vmul.f32 %v267, 2.0
    %v588 = vmul.f32 %v268, 2.0
    %v589 = vmul.f32 %v269, 2.0
    %v590 = vmul.f32 %v270, 2.0
    %v603 = vrot.slane %v579, 1
    %v604 = vrot.slane %v580, 1
    %v605 = vsel %vm352, %v603, %v604
    %v606 = vrot.slane %v581, 1
    %v607 = vsel %vm352, %v604, %v606
    %v608 = vrot.slane %v582, 1
    %v609 = vrot.slane %v583, 1
    %v610 = vsel %vm352, %v608, %v609
    %v611 = vrot.slane %v584, 1
    %v612 = vsel %vm352, %v609, %v611
    %v613 = vrot.slane %v585, 1
    %v614 = vrot.slane %v586, 1
    %v615 = vsel %vm352, %v613, %v614
    %v616 = vrot.slane %v587, 1
    %v617 = vsel %vm352, %v614, %v616
    %v618 = vrot.slane %v588, 1
    %v619 = vrot.slane %v589, 1
    %v620 = vsel %vm352, %v618, %v619
    %v621 = vrot.slane %v590, 1
    %v622 = vsel %vm352, %v619, %v621
    %v635 = vsub.f32 %v567, %v605
    %v636 = vsub.f32 %v568, %v607
    %v637 = vsub.f32 %v569, %v606
    %v638 = vsub.f32 %v570, %v610
    %v639 = vsub.f32 %v571, %v612
    %v640 = vsub.f32 %v572, %v611
    %v641 = vsub.f32 %v573, %v615
    %v642 = vsub.f32 %v574, %v617
    %v643 = vsub.f32 %v575, %v616
    %v644 = vsub.f32 %v576, %v620
    %v645 = vsub.f32 %v577, %v622
    %v646 = vsub.f32 %v578, %v621
    %v647 = vrot.slane %v259, 4
    %v648 = vrot.slane %v260, 4
    %v649 = vsel %vm397, %v647, %v648
    %v650 = vrot.slane %v261, 4
    %v651 = vsel %vm397, %v648, %v650
    %v652 = vrot.slane %v262, 4
    %v653 = vrot.slane %v263, 4
    %v654 = vsel %vm397, %v652, %v653
    %v655 = vrot.slane %v264, 4
    %v656 = vsel %vm397, %v653, %v655
    %v657 = vrot.slane %v265, 4
    %v658 = vrot.slane %v266, 4
    %v659 = vsel %vm397, %v657, %v658
    %v660 = vrot.slane %v267, 4
    %v661 = vsel %vm397, %v658, %v660
    %v662 = vrot.slane %v268, 4
    %v663 = vrot.slane %v269, 4
    %v664 = vsel %vm397, %v662, %v663
    %v665 = vrot.slane %v270, 4
    %v666 = vsel %vm397, %v663, %v665
    %v675 = vadd.f32 %v259, %v649
    %v676 = vadd.f32 %v260, %v651
    %v677 = vadd.f32 %v262, %v654
    %v678 = vadd.f32 %v263, %v656
    %v679 = vadd.f32 %v265, %v659
    %v680 = vadd.f32 %v266, %v661
    %v681 = vadd.f32 %v268, %v664
    %v682 = vadd.f32 %v269, %v666
    %v683 = vrot.slane %v579, 2
    %v684 = vrot.slane %v580, 2
    %v685 = vsel %vm283, %v683, %v684
    %v686 = vrot.slane %v581, 2
    %v687 = vsel %vm283, %v684, %v686
    %v688 = vrot.slane %v582, 2
    %v689 = vrot.slane %v583, 2
    %v690 = vsel %vm283, %v688, %v689
    %v691 = vrot.slane %v584, 2
    %v692 = vsel %vm283, %v689, %v691
    %v693 = vrot.slane %v585, 2
    %v694 = vrot.slane %v586, 2
    %v695 = vsel %vm283, %v693, %v694
    %v696 = vrot.slane %v587, 2
    %v697 = vsel %vm283, %v694, %v696
    %v698 = vrot.slane %v588, 2
    %v699 = vrot.slane %v589, 2
    %v700 = vsel %vm283, %v698, %v699
    %v701 = vrot.slane %v590, 2
    %v702 = vsel %vm283, %v699, %v701
    %v711 = vsub.f32 %v675, %v685
    %v712 = vsub.f32 %v676, %v687
    %v713 = vsub.f32 %v677, %v690
    %v714 = vsub.f32 %v678, %v692
    %v715 = vsub.f32 %v679, %v695
    %v716 = vsub.f32 %v680, %v697
    %v717 = vsub.f32 %v681, %v700
    %v718 = vsub.f32 %v682, %v702
    %v719 = vmul.f32 %v385, -6.0
    %v720 = vmul.f32 %v386, -6.0
    %v721 = vmul.f32 %v387, -6.0
    %v722 = vmul.f32 %v388, -6.0
    %v723 = vmul.f32 %v389, -6.0
    %v724 = vmul.f32 %v390, -6.0
    %v725 = vmul.f32 %v391, -6.0
    %v726 = vmul.f32 %v392, -6.0
    %v727 = vmul.f32 %v393, -6.0
    %v728 = vmul.f32 %v394, -6.0
    %v729 = vmul.f32 %v395, -6.0
    %v730 = vmul.f32 %v396, -6.0
    %v731 = vmul.f32 %v462, 2.0
    %v732 = vmul.f32 %v463, 2.0
    %v733 = vmul.f32 %v464, 2.0
    %v734 = vmul.f32 %v465, 2.0
    %v735 = vmul.f32 %v466, 2.0
    %v736 = vmul.f32 %v467, 2.0
    %v737 = vmul.f32 %v468, 2.0
    %v738 = vmul.f32 %v469, 2.0
    %vm747 = vcmask 1040384
    %v748 = vrot.slane %v731, 7
    %v749 = vrot.slane %v732, 7
    %v750 = vsel %vm747, %v748, %v749
    %v751 = vrot.slane %v733, 7
    %v752 = vrot.slane %v734, 7
    %v753 = vsel %vm747, %v751, %v752
    %v754 = vrot.slane %v735, 7
    %v755 = vrot.slane %v736, 7
    %v756 = vsel %vm747, %v754, %v755
    %v757 = vrot.slane %v737, 7
    %v758 = vrot.slane %v738, 7
    %v759 = vsel %vm747, %v757, %v758
    %v772 = vadd.f32 %v719, %v748
    %v773 = vadd.f32 %v720, %v750
    %v774 = vadd.f32 %v721, %v749
    %v775 = vadd.f32 %v722, %v751
    %v776 = vadd.f32 %v723, %v753
    %v777 = vadd.f32 %v724, %v752
    %v778 = vadd.f32 %v725, %v754
    %v779 = vadd.f32 %v726, %v756
    %v780 = vadd.f32 %v727, %v755
    %v781 = vadd.f32 %v728, %v757
    %v782 = vadd.f32 %v729, %v759
    %v783 = vadd.f32 %v730, %v758
    %v784 = vmul.f32 %v635, 2.0
    %v785 = vmul.f32 %v636, 2.0
    %v786 = vmul.f32 %v637, 2.0
    %v787 = vmul.f32 %v638, 2.0
    %v788 = vmul.f32 %v639, 2.0
    %v789 = vmul.f32 %v640, 2.0
    %v790 = vmul.f32 %v641, 2.0
    %v791 = vmul.f32 %v642, 2.0
    %v792 = vmul.f32 %v643, 2.0
    %v793 = vmul.f32 %v644, 2.0
    %v794 = vmul.f32 %v645, 2.0
    %v795 = vmul.f32 %v646, 2.0
    %v796 = vadd.f32 %v772, %v784
    %v797 = vadd.f32 %v773, %v785
    %v798 = vadd.f32 %v774, %v786
    %v799 = vadd.f32 %v775, %v787
    %v800 = vadd.f32 %v776, %v788
    %v801 = vadd.f32 %v777, %v789
    %v802 = vadd.f32 %v778, %v790
    %v803 = vadd.f32 %v779, %v791
    %v804 = vadd.f32 %v780, %v792
    %v805 = vadd.f32 %v781, %v793
    %v806 = vadd.f32 %v782, %v794
    %v807 = vadd.f32 %v783, %v795
    %v816 = vrot.slane %v711, 7
    %v817 = vrot.slane %v712, 7
    %v818 = vsel %vm747, %v816, %v817
    %v819 = vrot.slane %v713, 7
    %v820 = vrot.slane %v714, 7
    %v821 = vsel %vm747, %v819, %v820
    %v822 = vrot.slane %v715, 7
    %v823 = vrot.slane %v716, 7
    %v824 = vsel %vm747, %v822, %v823
    %v825 = vrot.slane %v717, 7
    %v826 = vrot.slane %v718, 7
    %v827 = vsel %vm747, %v825, %v826
    %v840 = vsub.f32 %v796, %v816
    %v841 = vsub.f32 %v797, %v818
    %v842 = vsub.f32 %v798, %v817
    %v843 = vsub.f32 %v799, %v819
    %v844 = vsub.f32 %v800, %v821
    %v845 = vsub.f32 %v801, %v820
    %v846 = vsub.f32 %v802, %v822
    %v847 = vsub.f32 %v803, %v824
    %v848 = vsub.f32 %v804, %v823
    %v849 = vsub.f32 %v805, %v825
    %v850 = vsub.f32 %v806, %v827
    %v851 = vsub.f32 %v807, %v826
    %v852 = vmul.f32 %v840, 0.083333336
    %v853 = vmul.f32 %v841, 0.083333336
    %v854 = vmul.f32 %v842, 0.083333336
    %v855 = vmul.f32 %v843, 0.083333336
    %v856 = vmul.f32 %v844, 0.083333336
    %v857 = vmul.f32 %v845, 0.083333336
    %v858 = vmul.f32 %v846, 0.083333336
    %v859 = vmul.f32 %v847, 0.083333336
    %v860 = vmul.f32 %v848, 0.083333336
    %v861 = vmul.f32 %v849, 0.083333336
    %v862 = vmul.f32 %v850, 0.083333336
    %v863 = vmul.f32 %v851, 0.083333336
    %s864 = scalar_lea.vmem [#allocation6], 16
    %865 = vst.msk [vmem:[%s864 - $0x1] sm:$0xfe] %vm482, %v852
    %866 = vst.msk [vmem:[%s864 + $0x7] sm:$0xff] %vm63, %v853
    %867 = vst.msk [vmem:[%s864 + $0xf] sm:$0x1] %vm485, %v854
    %868 = vst.msk [vmem:[%s864 + $0x2f] sm:$0xfe] %vm482, %v855
    %869 = vst.msk [vmem:[%s864 + $0x37] sm:$0xff] %vm63, %v856
    %870 = vst.msk [vmem:[%s864 + $0x3f] sm:$0x1] %vm485, %v857
    %871 = vst.msk [vmem:[%s864 + $0x5f] sm:$0xfe] %vm482, %v858
    %872 = vst.msk [vmem:[%s864 + $0x67] sm:$0xff] %vm63, %v859
    %873 = vst.msk [vmem:[%s864 + $0x6f] sm:$0x1] %vm485, %v860
    %874 = vst.msk [vmem:[%s864 + $0x8f] sm:$0xfe] %vm482, %v861
    %875 = vst.msk [vmem:[%s864 + $0x97] sm:$0xff] %vm63, %v862
    %876 = vst.msk [vmem:[%s864 + $0x9f] sm:$0x1] %vm485, %v863
    // Predicated region
    $region10: #{tpu_custom_call.1} parent=1 // pred_check
      _
    $region11: #{tpu_custom_call.1} parent=1 // pred_check_branch
      %878 = sbr.rel (0) target = $region13
    $region12: #{tpu_custom_call.1} parent=1 // pred_region
      %s880 = ssub.s32 3072, 3072
      %881 = vsyncadd [#allocation5], %s880
      %s882 = sshll.u32 [#allocation6], 4
      %s883 = int_to_ptr.vmem [resolvable:$true] %s882
      %888 = dma.vmem_to_hbm [thread:$0]  %s883, 3072, %s1, [#allocation5], 128, 128, 8
    $region13: #{tpu_custom_call.1} parent=1 // pred_fallthru
      _
    // Predicated region
    $region14: #{tpu_custom_call.1} parent=1 // pred_check
      _
    $region15: #{tpu_custom_call.1} parent=1 // pred_check_branch
      %890 = sbr.rel (0) target = $region17
    $region16: #{tpu_custom_call.1} parent=1 // pred_region
      %891 = dma.done [#allocation5], 3072
    $region17: #{tpu_custom_call.1} parent=1 // pred_fallthru
      _
    %892 = vsyncpa [#allocation4], 1
    %893 = vsyncpa [#allocation5], 1

</llo_original>
